<compile_context>
chip_gen: v7x
topology: tpu7x:2x2x1
jax: 0.10.0
libtpu: 0.0.40
codegen_flags: <defaults>
</compile_context>

<pallas_src>
import math
from functools import partial

import jax
import jax.numpy as jnp
from jax.experimental import pallas as pl
from jax.experimental.pallas import tpu as pltpu


def _attn_head_kernel(x_ref, w_ref, b_ref, mask_ref, o_ref, *, head_size):
    # x_ref:    (1, S, H)       bf16  hidden states of this batch element
    # w_ref:    (1, H, 3*hd)    bf16  fused, pre-transposed per-head QKV weight
    # b_ref:    (1, 1, 3*hd)    f32   fused per-head QKV bias (lane-dense row)
    # mask_ref: (1, 1, S)       f32   additive padding mask for this batch
    # o_ref:    (1, 1, S, hd)   f32   per-head context output
    x = x_ref[0]                      # (S, H)      bf16
    w = w_ref[0]                      # (H, 3*hd)   bf16
    b = b_ref[0]                      # (1, 3*hd)   f32

    # Fused QKV projection for this head: one MXU pass, f32 accumulation.
    qkv = jnp.dot(x, w, preferred_element_type=jnp.float32) + b   # (S, 3*hd) f32
    qkv = qkv.astype(jnp.bfloat16)

    q = qkv[:, :head_size]                       # (S, hd) bf16
    k = qkv[:, head_size:2 * head_size]          # (S, hd) bf16
    v = qkv[:, 2 * head_size:]                   # (S, hd) bf16

    # Scaled attention scores + additive mask (broadcast over queries).
    # Contract on the head dim directly (no explicit transpose materialized).
    scores = jax.lax.dot_general(
        q, k, (((1,), (1,)), ((), ())),
        preferred_element_type=jnp.float32)                       # (S_q, S_k) f32
    scores = scores * (1.0 / math.sqrt(head_size)) + mask_ref[0]

    # Softmax over keys in f32; denominator via EUP approx reciprocal.
    scores = scores - jnp.max(scores, axis=-1, keepdims=True)
    p = jnp.exp(scores)
    p = p * pl.reciprocal(jnp.sum(p, axis=-1, keepdims=True), approx=True)

    # Context = P @ V, bf16 MXU inputs with f32 accumulation.
    ctx = jnp.dot(p.astype(jnp.bfloat16), v,
                  preferred_element_type=jnp.float32)             # (S, hd) f32
    o_ref[0, 0] = ctx.astype(o_ref.dtype)


def gpt2_self_attention(hidden_states, attention_mask, params, *, num_heads):
    """hidden_states: [B, S, H]; attention_mask: [B, 1, 1, S] additive mask."""
    B, S, H = hidden_states.shape
    head_size = H // num_heads

    def per_head(w, b):
        # PyTorch nn.Linear weight is (out, in). Pre-transpose to (in, out) and
        # split the output dim per head -> (nh, H, hd); bias -> (nh, 1, hd).
        wt = jnp.transpose(w.T.reshape(H, num_heads, head_size), (1, 0, 2))
        bt = b.reshape(num_heads, 1, head_size)
        return wt, bt

    wq_h, bq_h = per_head(params['wq'], params['bq'])
    wk_h, bk_h = per_head(params['wk'], params['bk'])
    wv_h, bv_h = per_head(params['wv'], params['bv'])

    # Fused per-head QKV slabs.
    w_qkv = jnp.concatenate([wq_h, wk_h, wv_h], axis=-1).astype(jnp.bfloat16)  # (nh, H, 3hd)
    b_qkv = jnp.concatenate([bq_h, bk_h, bv_h], axis=-1).astype(jnp.float32)   # (nh, 1, 3hd)

    x_bf = hidden_states.astype(jnp.bfloat16)
    mask = attention_mask.reshape(B, 1, S).astype(jnp.float32)

    kernel = partial(_attn_head_kernel, head_size=head_size)

    out = pl.pallas_call(
        kernel,
        out_shape=jax.ShapeDtypeStruct((B, num_heads, S, head_size), jnp.float32),
        grid_spec=pltpu.PrefetchScalarGridSpec(
            num_scalar_prefetch=0,
            grid=(B, num_heads),   # head innermost: x/mask blocks constant over it
            in_specs=[
                pl.BlockSpec((1, S, H), lambda b, h: (b, 0, 0)),                # x
                pl.BlockSpec((1, H, 3 * head_size), lambda b, h: (h, 0, 0)),    # W_qkv
                pl.BlockSpec((1, 1, 3 * head_size), lambda b, h: (h, 0, 0)),    # b_qkv
                pl.BlockSpec((1, 1, S), lambda b, h: (b, 0, 0)),                # mask
            ],
            out_specs=pl.BlockSpec((1, 1, S, head_size),
                                   lambda b, h: (b, h, 0, 0)),
        ),
        compiler_params=pltpu.CompilerParams(
            dimension_semantics=("parallel", "parallel"),
            vmem_limit_bytes=64 * 1024 * 1024),
    )(x_bf, w_qkv, b_qkv, mask)

    # Merge heads in the wrapper (kernel stores stay lane-dense per head).
    return out.transpose(0, 2, 1, 3).reshape(B, S, H)


def _reference(hidden_states, attention_mask, params, *, num_heads):
    """Pure-JAX f32 reference mirroring the PyTorch module (dropout = identity)."""
    B, S, H = hidden_states.shape
    hd = H // num_heads

    def lin(x, w, b):
        return x @ w.T + b

    q = lin(hidden_states, params['wq'], params['bq'])
    k = lin(hidden_states, params['wk'], params['bk'])
    v = lin(hidden_states, params['wv'], params['bv'])

    def split(x):
        return x.reshape(B, S, num_heads, hd).transpose(0, 2, 1, 3)

    q, k, v = split(q), split(k), split(v)
    scores = jnp.einsum('bhqd,bhkd->bhqk', q, k) / math.sqrt(hd) + attention_mask
    p = jax.nn.softmax(scores, axis=-1)
    ctx = jnp.einsum('bhqk,bhkd->bhqd', p, v)
    return ctx.transpose(0, 2, 1, 3).reshape(B, S, H)


if __name__ == "__main__":
    # Small config consistent with the module: hidden=32, heads=4, seq=8, batch=2
    B, S, H, NH = 2, 8, 32, 4

    key = jax.random.PRNGKey(0)
    ks = jax.random.split(key, 8)
    scale = 1.0 / math.sqrt(H)
    params = {
        'wq': jax.random.normal(ks[0], (H, H), jnp.float32) * scale,
        'bq': jax.random.normal(ks[1], (H,), jnp.float32) * 0.01,
        'wk': jax.random.normal(ks[2], (H, H), jnp.float32) * scale,
        'bk': jax.random.normal(ks[3], (H,), jnp.float32) * 0.01,
        'wv': jax.random.normal(ks[4], (H, H), jnp.float32) * scale,
        'bv': jax.random.normal(ks[5], (H,), jnp.float32) * 0.01,
    }

    hidden_states = jax.random.normal(ks[6], (B, S, H), jnp.float32)
    # Additive attention mask: 0 for visible, -1e9 for masked (last 2 keys of batch 1)
    mask = jnp.zeros((B, 1, 1, S), jnp.float32)
    mask = mask.at[1, 0, 0, -2:].set(-1e9)

    out = gpt2_self_attention(hidden_states, mask, params, num_heads=NH)
    out = jax.block_until_ready(out)

    ref = _reference(hidden_states, mask, params, num_heads=NH)
    assert out.shape == (B, S, H)
    # bf16 matmuls with f32 accumulation vs f32 reference -> relaxed tolerance.
    assert jnp.allclose(out, ref, atol=5e-2, rtol=5e-2), "mismatch vs reference"

    print("KERNEL_OK")
</pallas_src>

<mosaic_0001>
module attributes {stable_mosaic.version = 11 : i64} {
  func.func @_attn_head_kernel(%arg0: i32, %arg1: i32, %arg2: memref<1x8x32xbf16, #tpu.memory_space<vmem>>, %arg3: memref<1x32x24xbf16, #tpu.memory_space<vmem>>, %arg4: memref<1x1x24xf32, #tpu.memory_space<vmem>>, %arg5: memref<1x1x8xf32, #tpu.memory_space<vmem>>, %arg6: memref<1x1x8x8xf32, #tpu.memory_space<vmem>>) attributes {dimension_semantics = [#tpu.dimension_semantics<parallel>, #tpu.dimension_semantics<parallel>], iteration_bounds = array<i64: 2, 4>, scalar_prefetch = 0 : i64, scratch_operands = 0 : i64, tpu.core_type = #tpu.core_type<tc>, window_params = [{transform_indices = @transform_0, window_bounds = array<i64: 1, 8, 32>}, {transform_indices = @transform_1, window_bounds = array<i64: 1, 32, 24>}, {transform_indices = @transform_2, window_bounds = array<i64: 1, 1, 24>}, {transform_indices = @transform_3, window_bounds = array<i64: 1, 1, 8>}, {transform_indices = @transform_4, window_bounds = array<i64: 1, 1, 8, 8>}]} {
    %c0 = arith.constant 0 : index
    %c0_0 = arith.constant 0 : index
    %c0_1 = arith.constant 0 : index
    %0 = vector.load %arg2[%c0, %c0_0, %c0_1] : memref<1x8x32xbf16, #tpu.memory_space<vmem>>, vector<1x8x32xbf16>
    %1 = vector.shape_cast %0 : vector<1x8x32xbf16> to vector<8x32xbf16>
    %c0_2 = arith.constant 0 : index
    %c0_3 = arith.constant 0 : index
    %c0_4 = arith.constant 0 : index
    %2 = vector.load %arg3[%c0_2, %c0_3, %c0_4] : memref<1x32x24xbf16, #tpu.memory_space<vmem>>, vector<1x32x24xbf16>
    %3 = vector.shape_cast %2 : vector<1x32x24xbf16> to vector<32x24xbf16>
    %c0_5 = arith.constant 0 : index
    %c0_6 = arith.constant 0 : index
    %c0_7 = arith.constant 0 : index
    %4 = vector.load %arg4[%c0_5, %c0_6, %c0_7] : memref<1x1x24xf32, #tpu.memory_space<vmem>>, vector<1x1x24xf32>
    %5 = vector.shape_cast %4 : vector<1x1x24xf32> to vector<1x24xf32>
    %cst = arith.constant dense<0.000000e+00> : vector<8x24xf32>
    %6 = tpu.matmul %1, %3, %cst {dimension_numbers = #tpu.dot_dimension_numbers<[1], [0], [0], [1], [0, 0, 1, 1], [], []>} : vector<8x32xbf16>, vector<32x24xbf16>, vector<8x24xf32> -> vector<8x24xf32>
    %7 = vector.broadcast %5 : vector<1x24xf32> to vector<8x24xf32>
    %8 = arith.addf %6, %7 : vector<8x24xf32>
    %9 = arith.truncf %8 : vector<8x24xf32> to vector<8x24xbf16>
    %10 = vector.extract_strided_slice %9 {offsets = [0, 0], sizes = [8, 8], strides = [1, 1]} : vector<8x24xbf16> to vector<8x8xbf16>
    %11 = vector.extract_strided_slice %9 {offsets = [0, 8], sizes = [8, 8], strides = [1, 1]} : vector<8x24xbf16> to vector<8x8xbf16>
    %12 = vector.extract_strided_slice %9 {offsets = [0, 16], sizes = [8, 8], strides = [1, 1]} : vector<8x24xbf16> to vector<8x8xbf16>
    %cst_8 = arith.constant dense<0.000000e+00> : vector<8x8xf32>
    %13 = tpu.matmul %10, %11, %cst_8 {dimension_numbers = #tpu.dot_dimension_numbers<[1], [1], [0], [0], [0, 0, 1, 0], [], []>} : vector<8x8xbf16>, vector<8x8xbf16>, vector<8x8xf32> -> vector<8x8xf32>
    %cst_9 = arith.constant 0.353553385 : f32
    %14 = vector.broadcast %cst_9 : f32 to vector<8x8xf32>
    %15 = arith.mulf %13, %14 : vector<8x8xf32>
    %c0_10 = arith.constant 0 : index
    %c0_11 = arith.constant 0 : index
    %c0_12 = arith.constant 0 : index
    %16 = vector.load %arg5[%c0_10, %c0_11, %c0_12] : memref<1x1x8xf32, #tpu.memory_space<vmem>>, vector<1x1x8xf32>
    %17 = vector.shape_cast %16 : vector<1x1x8xf32> to vector<1x8xf32>
    %18 = vector.broadcast %17 : vector<1x8xf32> to vector<8x8xf32>
    %19 = arith.addf %15, %18 : vector<8x8xf32>
    %cst_13 = arith.constant dense<0xFF800000> : vector<8xf32>
    %20 = vector.multi_reduction <maximumf>, %19, %cst_13 [1] : vector<8x8xf32> to vector<8xf32>
    %21 = vector.shape_cast %20 : vector<8xf32> to vector<8x1xf32>
    %22 = vector.broadcast %21 : vector<8x1xf32> to vector<8x8xf32>
    %23 = arith.subf %19, %22 : vector<8x8xf32>
    %24 = math.exp %23 : vector<8x8xf32>
    %cst_14 = arith.constant dense<0.000000e+00> : vector<8xf32>
    %25 = vector.multi_reduction <add>, %24, %cst_14 [1] : vector<8x8xf32> to vector<8xf32>
    %26 = vector.shape_cast %25 : vector<8xf32> to vector<8x1xf32>
    %27 = tpu.reciprocal %26 {approx = true} : vector<8x1xf32> -> vector<8x1xf32>
    %28 = vector.broadcast %27 : vector<8x1xf32> to vector<8x8xf32>
    %29 = arith.mulf %24, %28 : vector<8x8xf32>
    %30 = arith.truncf %29 : vector<8x8xf32> to vector<8x8xbf16>
    %cst_15 = arith.constant dense<0.000000e+00> : vector<8x8xf32>
    %31 = tpu.matmul %30, %12, %cst_15 {dimension_numbers = #tpu.dot_dimension_numbers<[1], [0], [0], [1], [0, 0, 1, 1], [], []>} : vector<8x8xbf16>, vector<8x8xbf16>, vector<8x8xf32> -> vector<8x8xf32>
    %c0_16 = arith.constant 0 : index
    %c0_17 = arith.constant 0 : index
    %c0_18 = arith.constant 0 : index
    %c0_19 = arith.constant 0 : index
    %32 = vector.load %arg6[%c0_16, %c0_17, %c0_18, %c0_19] : memref<1x1x8x8xf32, #tpu.memory_space<vmem>>, vector<1x1x8x8xf32>
    %33 = vector.shape_cast %32 : vector<1x1x8x8xf32> to vector<8x8xf32>
    %34 = vector.shape_cast %31 : vector<8x8xf32> to vector<1x1x8x8xf32>
    tpu.vector_store %arg6[%c0_16, %c0_17, %c0_18, %c0_19], %34 {strides = array<i32>} : memref<1x1x8x8xf32, #tpu.memory_space<vmem>>, vector<1x1x8x8xf32>,
    return
  }
  func.func @transform_0(%arg0: i32, %arg1: i32) -> (i32, i32, i32) {
    %c0_i32 = arith.constant 0 : i32
    %c0_i32_0 = arith.constant 0 : i32
    %c0_i32_1 = arith.constant 0 : i32
    return %arg0, %c0_i32, %c0_i32_0 : i32, i32, i32
  }
  func.func @transform_1(%arg0: i32, %arg1: i32) -> (i32, i32, i32) {
    %c0_i32 = arith.constant 0 : i32
    %c0_i32_0 = arith.constant 0 : i32
    %c0_i32_1 = arith.constant 0 : i32
    return %arg1, %c0_i32, %c0_i32_0 : i32, i32, i32
  }
  func.func @transform_2(%arg0: i32, %arg1: i32) -> (i32, i32, i32) {
    %c0_i32 = arith.constant 0 : i32
    %c0_i32_0 = arith.constant 0 : i32
    %c0_i32_1 = arith.constant 0 : i32
    return %arg1, %c0_i32, %c0_i32_0 : i32, i32, i32
  }
  func.func @transform_3(%arg0: i32, %arg1: i32) -> (i32, i32, i32) {
    %c0_i32 = arith.constant 0 : i32
    %c0_i32_0 = arith.constant 0 : i32
    %c0_i32_1 = arith.constant 0 : i32
    return %arg0, %c0_i32, %c0_i32_0 : i32, i32, i32
  }
  func.func @transform_4(%arg0: i32, %arg1: i32) -> (i32, i32, i32, i32) {
    %c0_i32 = arith.constant 0 : i32
    %c0_i32_0 = arith.constant 0 : i32
    %c0_i32_1 = arith.constant 0 : i32
    return %arg0, %arg1, %c0_i32, %c0_i32_0 : i32, i32, i32, i32
  }
}

</mosaic_0001>

<llo_original>
// kernel: tpu_custom_call.1
$region0: #{tpu_custom_call.1}
  #allocation0 [shape = 'u32[]', space=smem, size = 0x4, offset = 0x4, fixed_abs, tag = 'smem constant byte address 0x4 - core index']
  #allocation1 [shape = 'u32[144,128]{1,0:T(1,128)}', space=vmem, size = 0x12000, scoped, tag = 'internal scratch']
  %s0 = inlined_call_operand.hbm [shape: bf16[2,8,32], index: 0, kind: input, shape index: {}]
  %s1 = inlined_call_operand.hbm [shape: bf16[4,32,24], index: 1, kind: input, shape index: {}]
  %s2 = inlined_call_operand.hbm [shape: f32[4,1,24], index: 2, kind: input, shape index: {}]
  %s3 = inlined_call_operand.hbm [shape: f32[2,1,8], index: 3, kind: input, shape index: {}]
  %s4 = inlined_call_operand.hbm [shape: f32[2,4,8,8], index: 4, kind: output, shape index: {}]
  %s5 = sld [smem:[#allocation0]]
  $region65: #{tpu_custom_call.1} parent=0
    _
  %s7 = ssub.s32 1, %s5
  %s8 = scalar_select 0, %s7, %s5
  $region1: #{tpu_custom_call.1} parent=0
    #allocation2 [shape = 'u8[4096]{0}', space=vmem, size = 0x1000, scoped, tag = 'input window, operand 0']
    #allocation3 [shape = 's32[2]{0}', space=sflag, size = 0x8, scoped, tag = 'scoped memory for tpu_custom_call.1']
    #allocation4 [shape = 's32[2]{0}', space=sflag, size = 0x8, scoped, tag = 'scoped memory for tpu_custom_call.1']
    #allocation5 [shape = 'u8[16384]{0}', space=vmem, size = 0x4000, scoped, tag = 'input window, operand 1']
    #allocation6 [shape = 's32[2]{0}', space=sflag, size = 0x8, scoped, tag = 'scoped memory for tpu_custom_call.1']
    #allocation7 [shape = 'u8[1024]{0}', space=vmem, size = 0x400, scoped, tag = 'input window, operand 2']
    #allocation8 [shape = 'u8[1024]{0}', space=vmem, size = 0x400, scoped, tag = 'input window, operand 3']
    #allocation9 [shape = 's32[2]{0}', space=sflag, size = 0x8, scoped, tag = 'scoped memory for tpu_custom_call.1']
    #allocation10 [shape = 'u8[8192]{0}', space=vmem, size = 0x2000, scoped, tag = 'output window, operand 0']
    %9 = vsyncpa [#allocation3], 0
    %s10 = scalar_lea.sflag [#allocation3], 1
    %11 = vsyncpa %s10, 0
    %12 = vsyncpa [#allocation6], 0
    %s13 = scalar_lea.sflag [#allocation6], 1
    %14 = vsyncpa %s13, 0
    %15 = vsyncpa [#allocation9], 0
    %s16 = scalar_lea.sflag [#allocation9], 1
    %17 = vsyncpa %s16, 0
    %18 = vsyncpa [#allocation4], 0
    %s19 = scalar_lea.sflag [#allocation4], 1
    %20 = vsyncpa %s19, 0
    loop: start=0, step=1, limit=10
    $region2: #{tpu_custom_call.1} parent=1 // loop_pre_header
      _
    $region3: #{tpu_custom_call.1} parent=1 // loop_header
      %s22 = sphi 0, %s26
      %p23 = scmp.ge.s32.totalorder %s22, 10
      %s29 = sphi 0, %s41
      %s30 = sphi 0, %s37
      %s31 = sphi 0, %s29
      %s32 = sphi 0, %s30
      %s33 = sphi 0, %s31
      %s34 = sphi 0, %s32
      %s44 = sphi 0, %s46
      %s47 = sphi 0, %s44
      %s48 = sphi 0, %s47
      %s64 = sphi 0, %s48
      %s70 = sphi 0, %s72
      %s73 = sphi 0, %s70
      %s74 = sphi 0, %s73
      %s90 = sphi 0, %s74
      %s96 = sphi 0, %s98
      %s99 = sphi 0, %s96
      %s100 = sphi 0, %s99
      %s116 = sphi 0, %s100
      %s122 = sphi 0, %s124
      %s125 = sphi 0, %s122
      %s126 = sphi 0, %s125
      %s142 = sphi 0, %s126
      %s150 = sphi 0, %s152
      %s153 = sphi 0, %s150
      %s154 = sphi 0, %s153
      %s170 = sphi 0, %s154
    $region4: #{tpu_custom_call.1} parent=1 // loop_header_branch
      %25 = sbr.rel (%p23) target = $region8
    $region5: #{tpu_custom_call.1} parent=1 // loop_body
      %s27 = ssub.s32 %s22, 1
      %s28 = ssub.s32 %s22, 2
      %s35 = sadd.s32 1, %s30
      %p36 = scmp.ge.s32.totalorder %s35, 4
      %s37 = scalar_select %p36, 0, %s35
      %s38 = sadd.s32 1, %s29
      %s39 = scalar_select %p36, %s38, %s29
      %p40 = scmp.ge.s32.totalorder %s39, 2
      %s41 = scalar_select %p40, 0, %s39
      %s42 = ssub.s32 %s29, %s41
      %p43 = scmp.eq.s32.totalorder %s42, 0
      %s45 = sadd.s32 %s44, 1
      %s46 = scalar_select %p43, %s44, %s45
      %p49 = pneg %p43
      %p50 = scmp.eq.s32.totalorder %s22, 7
      %p51 = por %p49, %p50
      %p52 = scmp.ne.s32.totalorder %s44, %s47
      %p53 = scmp.eq.s32.totalorder %s22, 0
      %p54 = por %p52, %p53
      %p55 = scmp.ne.s32.totalorder %s44, %s47
      %p56 = scmp.eq.s32.totalorder %s27, 7
      %p57 = por %p55, %p56
      %p58 = scmp.ne.s32.totalorder %s47, %s48
      %p59 = scmp.eq.s32.totalorder %s27, 0
      %p60 = por %p58, %p59
      %p61 = scmp.ne.s32.totalorder %s47, %s48
      %p62 = scmp.eq.s32.totalorder %s28, 7
      %p63 = por %p61, %p62
      %p65 = scmp.ne.s32.totalorder %s48, %s64
      %p66 = scmp.eq.s32.totalorder %s28, 0
      %p67 = por %p65, %p66
      %s68 = ssub.s32 %s30, %s37
      %p69 = scmp.eq.s32.totalorder %s68, 0
      %s71 = sadd.s32 %s70, 1
      %s72 = scalar_select %p69, %s70, %s71
      %p75 = pneg %p69
      %p76 = scmp.eq.s32.totalorder %s22, 7
      %p77 = por %p75, %p76
      %p78 = scmp.ne.s32.totalorder %s70, %s73
      %p79 = scmp.eq.s32.totalorder %s22, 0
      %p80 = por %p78, %p79
      %p81 = scmp.ne.s32.totalorder %s70, %s73
      %p82 = scmp.eq.s32.totalorder %s27, 7
      %p83 = por %p81, %p82
      %p84 = scmp.ne.s32.totalorder %s73, %s74
      %p85 = scmp.eq.s32.totalorder %s27, 0
      %p86 = por %p84, %p85
      %p87 = scmp.ne.s32.totalorder %s73, %s74
      %p88 = scmp.eq.s32.totalorder %s28, 7
      %p89 = por %p87, %p88
      %p91 = scmp.ne.s32.totalorder %s74, %s90
      %p92 = scmp.eq.s32.totalorder %s28, 0
      %p93 = por %p91, %p92
      %s94 = ssub.s32 %s30, %s37
      %p95 = scmp.eq.s32.totalorder %s94, 0
      %s97 = sadd.s32 %s96, 1
      %s98 = scalar_select %p95, %s96, %s97
      %p101 = pneg %p95
      %p102 = scmp.eq.s32.totalorder %s22, 7
      %p103 = por %p101, %p102
      %p104 = scmp.ne.s32.totalorder %s96, %s99
      %p105 = scmp.eq.s32.totalorder %s22, 0
      %p106 = por %p104, %p105
      %p107 = scmp.ne.s32.totalorder %s96, %s99
      %p108 = scmp.eq.s32.totalorder %s27, 7
      %p109 = por %p107, %p108
      %p110 = scmp.ne.s32.totalorder %s99, %s100
      %p111 = scmp.eq.s32.totalorder %s27, 0
      %p112 = por %p110, %p111
      %p113 = scmp.ne.s32.totalorder %s99, %s100
      %p114 = scmp.eq.s32.totalorder %s28, 7
      %p115 = por %p113, %p114
      %p117 = scmp.ne.s32.totalorder %s100, %s116
      %p118 = scmp.eq.s32.totalorder %s28, 0
      %p119 = por %p117, %p118
      %s120 = ssub.s32 %s29, %s41
      %p121 = scmp.eq.s32.totalorder %s120, 0
      %s123 = sadd.s32 %s122, 1
      %s124 = scalar_select %p121, %s122, %s123
      %p127 = pneg %p121
      %p128 = scmp.eq.s32.totalorder %s22, 7
      %p129 = por %p127, %p128
      %p130 = scmp.ne.s32.totalorder %s122, %s125
      %p131 = scmp.eq.s32.totalorder %s22, 0
      %p132 = por %p130, %p131
      %p133 = scmp.ne.s32.totalorder %s122, %s125
      %p134 = scmp.eq.s32.totalorder %s27, 7
      %p135 = por %p133, %p134
      %p136 = scmp.ne.s32.totalorder %s125, %s126
      %p137 = scmp.eq.s32.totalorder %s27, 0
      %p138 = por %p136, %p137
      %p139 = scmp.ne.s32.totalorder %s125, %s126
      %p140 = scmp.eq.s32.totalorder %s28, 7
      %p141 = por %p139, %p140
      %p143 = scmp.ne.s32.totalorder %s126, %s142
      %p144 = scmp.eq.s32.totalorder %s28, 0
      %p145 = por %p143, %p144
      %s146 = ssub.s32 %s29, %s41
      %s147 = ssub.s32 %s30, %s37
      %s148 = sor.u32 %s146, %s147
      %p149 = scmp.eq.s32.totalorder %s148, 0
      %s151 = sadd.s32 %s150, 1
      %s152 = scalar_select %p149, %s150, %s151
      %p155 = pneg %p149
      %p156 = scmp.eq.s32.totalorder %s22, 7
      %p157 = por %p155, %p156
      %p158 = scmp.ne.s32.totalorder %s150, %s153
      %p159 = scmp.eq.s32.totalorder %s22, 0
      %p160 = por %p158, %p159
      %p161 = scmp.ne.s32.totalorder %s150, %s153
      %p162 = scmp.eq.s32.totalorder %s27, 7
      %p163 = por %p161, %p162
      %p164 = scmp.ne.s32.totalorder %s153, %s154
      %p165 = scmp.eq.s32.totalorder %s27, 0
      %p166 = por %p164, %p165
      %p167 = scmp.ne.s32.totalorder %s153, %s154
      %p168 = scmp.eq.s32.totalorder %s28, 7
      %p169 = por %p167, %p168
      %p171 = scmp.ne.s32.totalorder %s154, %s170
      %p172 = scmp.eq.s32.totalorder %s28, 0
      %p173 = por %p171, %p172
      %p174 = scmp.le.s32.totalorder 1, %s22
      %p175 = scmp.lt.s32.totalorder %s22, 9
      %p176 = pnand %p174, %p175
      %p177 = pneg %p176
      // Predicated region
      $region9: #{tpu_custom_call.1} parent=5 // pred_check
        _
      $region10: #{tpu_custom_call.1} parent=5 // pred_check_branch
        %179 = sbr.rel (%p176) target = $region12
      $region11: #{tpu_custom_call.1} parent=5 // pred_region
        %s180 = ssub.s32 %s22, 1
      $region12: #{tpu_custom_call.1} parent=5 // pred_fallthru
        _
      %p181 = scmp.lt.s32.totalorder %s22, 8
      // Predicated region
      $region13: #{tpu_custom_call.1} parent=5 // pred_check
        %p182 = pneg %p181
      $region14: #{tpu_custom_call.1} parent=5 // pred_check_branch
        %184 = sbr.rel (%p182) target = $region16
      $region15: #{tpu_custom_call.1} parent=5 // pred_region
        // Predicated region
        $region17: #{tpu_custom_call.1} parent=15 // pred_check
          %p185 = pneg %p54
        $region18: #{tpu_custom_call.1} parent=15 // pred_check_branch
          %187 = sbr.rel (%p185) target = $region20
        $region19: #{tpu_custom_call.1} parent=15 // pred_region
          %s188 = sand.u32 %s44, 1
          %s189 = scalar_lea.sflag [#allocation3], %s188
          %s190 = sand.u32 %s44, 1
          %s191 = smul.addr %s190, 4
          %s192 = scalar_lea.vmem [#allocation2], %s191
          %s194 = ssub.s32 64, 64
          %195 = vsyncadd %s189, %s194
          %s196 = smul.addr %s29, 64
          %s197 = scalar_lea.hbm %s0, %s196
          %s199 = sshll.u32 %s192, 4
          %s200 = int_to_ptr.vmem [resolvable:$true] %s199
          %202 = dma.hbm_to_vmem [thread:$0]  %s197, 64, %s200, %s189
        $region20: #{tpu_custom_call.1} parent=15 // pred_fallthru
          _
        // Predicated region
        $region21: #{tpu_custom_call.1} parent=15 // pred_check
          %p203 = pneg %p80
        $region22: #{tpu_custom_call.1} parent=15 // pred_check_branch
          %205 = sbr.rel (%p203) target = $region24
        $region23: #{tpu_custom_call.1} parent=15 // pred_region
          %s206 = sand.u32 %s22, 1
          %s207 = scalar_lea.sflag [#allocation6], %s206
          %s208 = sand.u32 %s70, 1
          %s209 = smul.addr %s208, 16
          %s210 = scalar_lea.vmem [#allocation5], %s209
          %s212 = ssub.s32 256, 256
          %213 = vsyncadd %s207, %s212
          %s214 = smul.addr %s30, 4
          %s215 = smul.addr %s214, 64
          %s216 = scalar_lea.hbm %s1, %s215
          %s217 = sshll.u32 %s210, 4
          %s218 = int_to_ptr.vmem [resolvable:$true] %s217
          %223 = dma.hbm_to_vmem [thread:$0]  %s216, 256, %s218, %s207, 64, 64, 4
        $region24: #{tpu_custom_call.1} parent=15 // pred_fallthru
          _
        // Predicated region
        $region25: #{tpu_custom_call.1} parent=15 // pred_check
          %p224 = pneg %p106
        $region26: #{tpu_custom_call.1} parent=15 // pred_check_branch
          %226 = sbr.rel (%p224) target = $region28
        $region27: #{tpu_custom_call.1} parent=15 // pred_region
          %s227 = sand.u32 %s22, 1
          %s228 = scalar_lea.sflag [#allocation6], %s227
          %s229 = sand.u32 %s96, 1
          %s230 = scalar_lea.vmem [#allocation7], %s229
          %s232 = ssub.s32 16, 16
          %233 = vsyncadd %s228, %s232
          %s234 = smul.addr %s30, 16
          %s235 = scalar_lea.hbm %s2, %s234
          %s237 = sshll.u32 %s230, 4
          %s238 = int_to_ptr.vmem [resolvable:$true] %s237
          %240 = dma.hbm_to_vmem [thread:$0]  %s235, 16, %s238, %s228
        $region28: #{tpu_custom_call.1} parent=15 // pred_fallthru
          _
        // Predicated region
        $region29: #{tpu_custom_call.1} parent=15 // pred_check
          %p241 = pneg %p132
        $region30: #{tpu_custom_call.1} parent=15 // pred_check_branch
          %243 = sbr.rel (%p241) target = $region32
        $region31: #{tpu_custom_call.1} parent=15 // pred_region
          %s244 = sand.u32 %s122, 1
          %s245 = scalar_lea.sflag [#allocation9], %s244
          %s246 = sand.u32 %s122, 1
          %s247 = scalar_lea.vmem [#allocation8], %s246
          %s249 = ssub.s32 16, 16
          %250 = vsyncadd %s245, %s249
          %s251 = smul.addr %s29, 16
          %s252 = scalar_lea.hbm %s3, %s251
          %s254 = sshll.u32 %s247, 4
          %s255 = int_to_ptr.vmem [resolvable:$true] %s254
          %257 = dma.hbm_to_vmem [thread:$0]  %s252, 16, %s255, %s245
        $region32: #{tpu_custom_call.1} parent=15 // pred_fallthru
          _
      $region16: #{tpu_custom_call.1} parent=5 // pred_fallthru
        _
      %p258 = scmp.le.s32.totalorder 1, %s22
      %p259 = scmp.lt.s32.totalorder %s22, 9
      %p260 = pnand %p258, %p259
      %p261 = pneg %p260
      // Predicated region
      $region33: #{tpu_custom_call.1} parent=5 // pred_check
        _
      $region34: #{tpu_custom_call.1} parent=5 // pred_check_branch
        %263 = sbr.rel (%p260) target = $region36
      $region35: #{tpu_custom_call.1} parent=5 // pred_region
        %s264 = ssub.s32 %s22, 1
        %s265 = sand.u32 %s47, 1
        %s266 = scalar_lea.sflag [#allocation3], %s265
        %s267 = sand.u32 %s47, 1
        %s268 = smul.addr %s267, 4
        %s269 = scalar_lea.vmem [#allocation2], %s268
        // Predicated region
        $region37: #{tpu_custom_call.1} parent=35 // pred_check
          %p270 = pneg %p60
        $region38: #{tpu_custom_call.1} parent=35 // pred_check_branch
          %272 = sbr.rel (%p270) target = $region40
        $region39: #{tpu_custom_call.1} parent=35 // pred_region
          %273 = dma.done %s266, 64
        $region40: #{tpu_custom_call.1} parent=35 // pred_fallthru
          _
        %s274 = sand.u32 %s27, 1
        %s275 = scalar_lea.sflag [#allocation6], %s274
        %s276 = sand.u32 %s73, 1
        %s277 = smul.addr %s276, 16
        %s278 = scalar_lea.vmem [#allocation5], %s277
        // Predicated region
        $region41: #{tpu_custom_call.1} parent=35 // pred_check
          %p279 = pneg %p86
        $region42: #{tpu_custom_call.1} parent=35 // pred_check_branch
          %281 = sbr.rel (%p279) target = $region44
        $region43: #{tpu_custom_call.1} parent=35 // pred_region
          %282 = dma.done %s275, 256
        $region44: #{tpu_custom_call.1} parent=35 // pred_fallthru
          _
        %s283 = sand.u32 %s27, 1
        %s284 = scalar_lea.sflag [#allocation6], %s283
        %s285 = sand.u32 %s99, 1
        %s286 = scalar_lea.vmem [#allocation7], %s285
        // Predicated region
        $region45: #{tpu_custom_call.1} parent=35 // pred_check
          %p287 = pneg %p112
        $region46: #{tpu_custom_call.1} parent=35 // pred_check_branch
          %289 = sbr.rel (%p287) target = $region48
        $region47: #{tpu_custom_call.1} parent=35 // pred_region
          %290 = dma.done %s284, 16
        $region48: #{tpu_custom_call.1} parent=35 // pred_fallthru
          _
        %s291 = sand.u32 %s125, 1
        %s292 = scalar_lea.sflag [#allocation9], %s291
        %s293 = sand.u32 %s125, 1
        %s294 = scalar_lea.vmem [#allocation8], %s293
        // Predicated region
        $region49: #{tpu_custom_call.1} parent=35 // pred_check
          %p295 = pneg %p138
        $region50: #{tpu_custom_call.1} parent=35 // pred_check_branch
          %297 = sbr.rel (%p295) target = $region52
        $region51: #{tpu_custom_call.1} parent=35 // pred_region
          %298 = dma.done %s292, 16
        $region52: #{tpu_custom_call.1} parent=35 // pred_fallthru
          _
        %s299 = sand.u32 %s47, 1
        %s300 = scalar_lea.sflag [#allocation3], %s299
        %s301 = sand.u32 %s47, 1
        %s302 = smul.addr %s301, 4
        %s303 = scalar_lea.vmem [#allocation2], %s302
        %p304 = pneg %p60
        %p305 = pneg %p57
        %s306 = sand.u32 %s27, 1
        %s307 = scalar_lea.sflag [#allocation6], %s306
        %s308 = sand.u32 %s73, 1
        %s309 = smul.addr %s308, 16
        %s310 = scalar_lea.vmem [#allocation5], %s309
        %p311 = pneg %p86
        %p312 = pneg %p83
        %s313 = sand.u32 %s27, 1
        %s314 = scalar_lea.sflag [#allocation6], %s313
        %s315 = sand.u32 %s99, 1
        %s316 = scalar_lea.vmem [#allocation7], %s315
        %p317 = pneg %p112
        %p318 = pneg %p109
        %s319 = sand.u32 %s125, 1
        %s320 = scalar_lea.sflag [#allocation9], %s319
        %s321 = sand.u32 %s125, 1
        %s322 = scalar_lea.vmem [#allocation8], %s321
        %p323 = pneg %p138
        %p324 = pneg %p135
        %p325 = pneg %p166
        %p326 = pneg %p163
        %s327 = sand.u32 %s153, 1
        %s328 = scalar_lea.sflag [#allocation4], %s327
        %s329 = sand.u32 %s153, 1
        %s330 = smul.addr %s329, 8
        %s331 = scalar_lea.vmem [#allocation10], %s330
        %v333 = vld [vmem:[%s269] sm:$0xf]
        %v334 = vld [vmem:[%s278] sm:$0xf]
        %v335 = vld [vmem:[%s278 + $0x4] sm:$0xf]
        %v336 = vld [vmem:[%s278 + $0x8] sm:$0xf]
        %v337 = vld [vmem:[%s278 + $0xc] sm:$0xf]
        %v338 = vld [vmem:[%s286] sm:$0x1]
        %v340 = vlaneseq
        %v341 = vshrl.u32 %v340, 7
        %v342 = vsub.s32 0, %v341
        %v343 = vrot.slane %v338, %v342
        %v349 = vunpack.c.l.b16 %v334
        %v350 = vunpack.c.l.b16 %v335
        %v351 = vunpack.c.l.b16 %v336
        %v352 = vunpack.c.l.b16 %v337
        %v353 = vpack.c.b16 %v350, %v349
        %v354 = vpack.c.b16 %v352, %v351
        %vm357 = vcmask 261120
        %v359 = vsel %vm357, %v333, 0
        %361 = vmatprep.subr.bf16.mxu0 0
        %362 = vmatpush1.bf16.msra.mxu0 %v353
        %363 = vmatprep.subr.bf16.mxu0 0
        %364 = vmatpush1.bf16.msra.mxu0 %v354
        %365 = vmatprep.subr.bf16.mxu0 0
        %366 = vmatpush1.bf16.msra.mxu0 0
        %367 = vmatprep.subr.bf16.mxu0 0
        %368 = vmatpush1.bf16.msra.mxu0 0
        %369 = vmatprep.subr.bf16.mxu0 0
        %370 = vmatpush1.bf16.msra.mxu0 0
        %371 = vmatprep.subr.bf16.mxu0 0
        %372 = vmatpush1.bf16.msra.mxu0 0
        %373 = vmatprep.subr.bf16.mxu0 0
        %374 = vmatpush1.bf16.msra.mxu0 0
        %375 = vmatprep.subr.bf16.mxu0 0
        %376 = vmatpush1.bf16.msra.mxu0 0
        %377 = vmatprep.subr.bf16.mxu0 0
        %378 = vmatpush1.bf16.msra.mxu0 0
        %379 = vmatprep.subr.bf16.mxu0 0
        %380 = vmatpush1.bf16.msra.mxu0 0
        %381 = vmatprep.subr.bf16.mxu0 0
        %382 = vmatpush1.bf16.msra.mxu0 0
        %383 = vmatprep.subr.bf16.mxu0 0
        %384 = vmatpush1.bf16.msra.mxu0 0
        %385 = vmatprep.subr.bf16.mxu0 0
        %386 = vmatpush1.bf16.msra.mxu0 0
        %387 = vmatprep.subr.bf16.mxu0 0
        %388 = vmatpush1.bf16.msra.mxu0 0
        %389 = vmatprep.subr.bf16.mxu0 0
        %390 = vmatpush1.bf16.msra.mxu0 0
        %391 = vmatprep.subr.bf16.mxu0 0
        %392 = vmatpush1.bf16.msra.mxu0 0
        %393 = vmatprep.mubr.bf16.mxu0 0
        %394 = vmatmul.mubr.bf16.gmra.mrb[0].mxu0 %v359
        %v395 = vpop.f32.mrb[0].mxu0
        %v396 = vadd.f32 %v343, %v395
        %v397 = vpop.f32.mrb[0].mxu0
        %v398 = vpop.f32.mrb[0].mxu0
        %v399 = vpop.f32.mrb[0].mxu0
        %400 = vdwg.mxu0
        %v401 = vpack.c.bf16 %v396, %v396
        %403 = vrot.lane.b32.xlu0 %v401, 120
        %v404 = vpop.permute.xlu0 %403
        %vm405 = vcmask 64512
        %v407 = vsel %vm405, %v401, 0
        %v410 = vsel %vm405, %v404, 0
        %412 = vmatprep.subr.bf16.mxu0 0
        %413 = vmatpush1.bf16.xpose.msra.mxu0 %v410
        %414 = vmatprep.subr.bf16.mxu0 0
        %415 = vmatpush1.bf16.xpose.msra.mxu0 0
        %416 = vmatprep.subr.bf16.mxu0 0
        %417 = vmatpush1.bf16.xpose.msra.mxu0 0
        %418 = vmatprep.subr.bf16.mxu0 0
        %419 = vmatpush1.bf16.xpose.msra.mxu0 0
        %420 = vmatprep.subr.bf16.mxu0 0
        %421 = vmatpush1.bf16.xpose.msra.mxu0 0
        %422 = vmatprep.subr.bf16.mxu0 0
        %423 = vmatpush1.bf16.xpose.msra.mxu0 0
        %424 = vmatprep.subr.bf16.mxu0 0
        %425 = vmatpush1.bf16.xpose.msra.mxu0 0
        %426 = vmatprep.subr.bf16.mxu0 0
        %427 = vmatpush1.bf16.xpose.msra.mxu0 0
        %428 = vmatprep.subr.bf16.mxu0 0
        %429 = vmatpush1.bf16.xpose.msra.mxu0 0
        %430 = vmatprep.subr.bf16.mxu0 0
        %431 = vmatpush1.bf16.xpose.msra.mxu0 0
        %432 = vmatprep.subr.bf16.mxu0 0
        %433 = vmatpush1.bf16.xpose.msra.mxu0 0
        %434 = vmatprep.subr.bf16.mxu0 0
        %435 = vmatpush1.bf16.xpose.msra.mxu0 0
        %436 = vmatprep.subr.bf16.mxu0 0
        %437 = vmatpush1.bf16.xpose.msra.mxu0 0
        %438 = vmatprep.subr.bf16.mxu0 0
        %439 = vmatpush1.bf16.xpose.msra.mxu0 0
        %440 = vmatprep.subr.bf16.mxu0 0
        %441 = vmatpush1.bf16.xpose.msra.mxu0 0
        %442 = vmatprep.subr.bf16.mxu0 0
        %443 = vmatpush1.bf16.xpose.msra.mxu0 0
        %444 = vmatprep.mubr.bf16.mxu0 0
        %445 = vmatmul.mubr.bf16.gmra.mrb[0].mxu0 %v407
        %v446 = vpop.f32.mrb[0].mxu0
        %v447 = vadd.f32 0.0, %v446
        %v448 = vpop.f32.mrb[0].mxu0
        %v449 = vpop.f32.mrb[0].mxu0
        %v450 = vpop.f32.mrb[0].mxu0
        %451 = vdwg.mxu0
        %v452 = vmul.f32 %v447, 0.35355338
        %v453 = vld [vmem:[%s294] sm:$0x1]
        %v455 = vlaneseq
        %v456 = vshrl.u32 %v455, 7
        %v457 = vsub.s32 0, %v456
        %v458 = vrot.slane %v453, %v457
        %v460 = vadd.f32 %v452, %v458
        %v461 = vsel %vm405, %v460, -inf
        %462 = vmax.xlane.f32.xlu0 %v461
        %v463 = vpop.xlane.xlu0 %462
        %v464 = vsub.f32 %v460, %v463
        %v465 = vmul.f32 %v464, 1.442695
        %v466 = vpow.pop %v465
        %v467 = vsel %vm405, %v466, 0.0
        %468 = vadd.xlane.f32.xlu0 %v467
        %v469 = vpop.xlane.xlu0 %468
        %v470 = vrcp.pop %v469
        %v471 = vmul.f32 %v466, %v470
        %v472 = vpack.c.bf16 %v471, %v471
        %473 = vrot.lane.b32.xlu0 %v401, 112
        %v474 = vpop.permute.xlu0 %473
        %v476 = vsel %vm405, %v472, 0
        %vm478 = vcmask 1043456
        %v480 = vsel %vm478, %v474, 0
        %482 = vmatprep.subr.bf16.mxu0 0
        %483 = vmatpush1.bf16.msra.mxu0 %v480
        %484 = vmatprep.subr.bf16.mxu0 0
        %485 = vmatpush1.bf16.msra.mxu0 0
        %486 = vmatprep.subr.bf16.mxu0 0
        %487 = vmatpush1.bf16.msra.mxu0 0
        %488 = vmatprep.subr.bf16.mxu0 0
        %489 = vmatpush1.bf16.msra.mxu0 0
        %490 = vmatprep.subr.bf16.mxu0 0
        %491 = vmatpush1.bf16.msra.mxu0 0
        %492 = vmatprep.subr.bf16.mxu0 0
        %493 = vmatpush1.bf16.msra.mxu0 0
        %494 = vmatprep.subr.bf16.mxu0 0
        %495 = vmatpush1.bf16.msra.mxu0 0
        %496 = vmatprep.subr.bf16.mxu0 0
        %497 = vmatpush1.bf16.msra.mxu0 0
        %498 = vmatprep.subr.bf16.mxu0 0
        %499 = vmatpush1.bf16.msra.mxu0 0
        %500 = vmatprep.subr.bf16.mxu0 0
        %501 = vmatpush1.bf16.msra.mxu0 0
        %502 = vmatprep.subr.bf16.mxu0 0
        %503 = vmatpush1.bf16.msra.mxu0 0
        %504 = vmatprep.subr.bf16.mxu0 0
        %505 = vmatpush1.bf16.msra.mxu0 0
        %506 = vmatprep.subr.bf16.mxu0 0
        %507 = vmatpush1.bf16.msra.mxu0 0
        %508 = vmatprep.subr.bf16.mxu0 0
        %509 = vmatpush1.bf16.msra.mxu0 0
        %510 = vmatprep.subr.bf16.mxu0 0
        %511 = vmatpush1.bf16.msra.mxu0 0
        %512 = vmatprep.subr.bf16.mxu0 0
        %513 = vmatpush1.bf16.msra.mxu0 0
        %514 = vmatprep.mubr.bf16.mxu0 0
        %515 = vmatmul.mubr.bf16.gmra.mrb[0].mxu0 %v476
        %v516 = vpop.f32.mrb[0].mxu0
        %v517 = vadd.f32 0.0, %v516
        %v518 = vpop.f32.mrb[0].mxu0
        %v519 = vpop.f32.mrb[0].mxu0
        %v520 = vpop.f32.mrb[0].mxu0
        %521 = vdwg.mxu0
        %522 = vst.msk [vmem:[%s331] sm:$0xff] %vm405, %v517
        %s523 = sand.u32 %s153, 1
        %s524 = scalar_lea.sflag [#allocation4], %s523
        %s525 = sand.u32 %s153, 1
        %s526 = smul.addr %s525, 8
        %s527 = scalar_lea.vmem [#allocation10], %s526
        // Predicated region
        $region53: #{tpu_custom_call.1} parent=35 // pred_check
          %p528 = pneg %p163
        $region54: #{tpu_custom_call.1} parent=35 // pred_check_branch
          %530 = sbr.rel (%p528) target = $region56
        $region55: #{tpu_custom_call.1} parent=35 // pred_region
          %s532 = ssub.s32 128, 128
          %533 = vsyncadd %s524, %s532
          %s534 = smul.addr %s31, 4
          %s535 = sadd.s32 %s32, %s534
          %s536 = smul.addr %s535, 128
          %s537 = scalar_lea.hbm %s4, %s536
          %s539 = sshll.u32 %s527, 4
          %s540 = int_to_ptr.vmem [resolvable:$true] %s539
          %542 = dma.vmem_to_hbm [thread:$0]  %s540, 128, %s537, %s524
        $region56: #{tpu_custom_call.1} parent=35 // pred_fallthru
          _
      $region36: #{tpu_custom_call.1} parent=5 // pred_fallthru
        _
      %p543 = scmp.le.s32.totalorder 2, %s22
      // Predicated region
      $region57: #{tpu_custom_call.1} parent=5 // pred_check
        %p544 = pneg %p543
      $region58: #{tpu_custom_call.1} parent=5 // pred_check_branch
        %546 = sbr.rel (%p544) target = $region60
      $region59: #{tpu_custom_call.1} parent=5 // pred_region
        %s547 = ssub.s32 %s22, 2
        // Predicated region
        $region61: #{tpu_custom_call.1} parent=59 // pred_check
          %p548 = pneg %p169
        $region62: #{tpu_custom_call.1} parent=59 // pred_check_branch
          %550 = sbr.rel (%p548) target = $region64
        $region63: #{tpu_custom_call.1} parent=59 // pred_region
          %s551 = sand.u32 %s154, 1
          %s552 = scalar_lea.sflag [#allocation4], %s551
          %s553 = sand.u32 %s154, 1
          %s554 = smul.addr %s553, 8
          %s555 = scalar_lea.vmem [#allocation10], %s554
          %556 = dma.done %s552, 128
        $region64: #{tpu_custom_call.1} parent=59 // pred_fallthru
          _
      $region60: #{tpu_custom_call.1} parent=5 // pred_fallthru
        _
    $region6: #{tpu_custom_call.1} parent=1 // loop_footer
      %s26 = sadd.s32 1, %s22
    $region7: #{tpu_custom_call.1} parent=1 // loop_footer_branch
      %21 = sbr.rel target = $region3
    $region8: #{tpu_custom_call.1} parent=1 // loop_exit
      _
    %557 = vsyncpa [#allocation3], 1
    %s558 = scalar_lea.sflag [#allocation3], 1
    %559 = vsyncpa %s558, 1
    %560 = vsyncpa [#allocation6], 1
    %s561 = scalar_lea.sflag [#allocation6], 1
    %562 = vsyncpa %s561, 1
    %563 = vsyncpa [#allocation9], 1
    %s564 = scalar_lea.sflag [#allocation9], 1
    %565 = vsyncpa %s564, 1
    %566 = vsyncpa [#allocation4], 1
    %s567 = scalar_lea.sflag [#allocation4], 1
    %568 = vsyncpa %s567, 1

</llo_original>
